<compile_context>
chip_gen: v5e
topology: v5e:2x2
jax: 0.10.0
libtpu: 0.0.40
codegen_flags: <defaults>
</compile_context>

<pallas_src>
import functools

import jax
import jax.numpy as jnp
from jax.experimental import pallas as pl
from jax.experimental.pallas import tpu as pltpu


# ------------------------------ Pallas kernel ------------------------------ #
def _mab_rnn_kernel(x_ref, w1c_ref, b1c_ref, w2f_ref, b2f_ref, w2w_ref, b2w_ref,
                    out_ref, pool_ref, h_sc, *, tt, m, c, reverse):
    """One grid step = `tt` timesteps of the MAB recurrence.

    x_ref    : (C, tt*m)  io-dtype   input slab (m = N*H*W lanes per timestep)
    w1c/b1c  : fused layer-1 of ffn_f|ffn_w  -> (2C, C) / (2C, 1)
    w2f/w2w  : layer-2 weights of ffn_f / ffn_w (C, C), biases (C, 1)
    out_ref  : (C, tt*m)  io-dtype   recurrence output slab
    pool_ref : (C, m)     f32        running sum over all timesteps (resident)
    h_sc     : (C, m)     f32        recurrent hidden-state carry
    """
    g = pl.program_id(0)

    @pl.when(g == 0)
    def _():
        h_sc[...] = jnp.zeros_like(h_sc)          # h_prev = 0  <=>  h0 = (1-f)*z
        pool_ref[...] = jnp.zeros_like(pool_ref)

    x = x_ref[...]                                # (C, tt*m)
    io_dt = x.dtype

    # Fused layer 1 of both FFNs: one (2C, C) @ (C, tt*m) MXU matmul, f32 acc.
    a1 = jnp.tanh(jnp.dot(w1c_ref[...], x, preferred_element_type=jnp.float32)
                  + b1c_ref[...])                 # (2C, tt*m) f32

    # Layer 2 (inputs differ, so two matmuls).  Z = tanh(.), F = sigmoid(.)
    z = jnp.tanh(jnp.dot(w2f_ref[...], a1[:c].astype(io_dt),
                         preferred_element_type=jnp.float32) + b2f_ref[...])
    f = jax.nn.sigmoid(jnp.dot(w2w_ref[...], a1[c:].astype(io_dt),
                               preferred_element_type=jnp.float32) + b2w_ref[...])

    # Sequential recurrence over the tt local timesteps (static unroll; lane
    # slices are 128-aligned because m is a multiple of 128).
    h = h_sc[...]                                 # (C, m) f32
    pool = pool_ref[...]
    steps = range(tt - 1, -1, -1) if reverse else range(tt)
    for lt in steps:
        lo, hi = lt * m, (lt + 1) * m
        ft = f[:, lo:hi]
        zt = z[:, lo:hi]
        h = ft * h + (1.0 - ft) * zt
        pool = pool + h
        out_ref[:, lo:hi] = h.astype(out_ref.dtype)
    h_sc[...] = h
    pool_ref[...] = pool


# -------------------------------- wrapper ----------------------------------- #
def _choose_tt(T, m, c, itemsize, budget=2 << 20):
    """Largest divisor of T whose (C, tt*m) block stays under `budget` bytes."""
    best = 1
    for cand in range(1, T + 1):
        if T % cand == 0 and cand * m * c * itemsize <= budget:
            best = cand
    return best


def mab_forward(x, params, *, enable_ca=True, reverse=False,
                io_dtype=jnp.bfloat16, tt=None):
    """x: (N, C, T, H, W) float32 (PyTorch NCDHW). Returns float32, same shape."""
    N, C, T, H, W = x.shape
    M = N * H * W
    w1f, b1f, w2f, b2f, w1w, b1w, w2w, b2w, wc, bc = params

    itemsize = jnp.dtype(io_dtype).itemsize
    if tt is None:
        tt = _choose_tt(T, M, C, itemsize)
    if (tt * M) % 128 != 0 and tt != T:
        tt = T                                    # keep blocks lane-aligned
    assert T % tt == 0, "tt must divide T"
    nb = T // tt

    # channel-major, lane-dense slab: (C, T*N*H*W); bf16 halves HBM traffic.
    xt = jnp.transpose(x, (1, 2, 0, 3, 4)).reshape(C, T * M).astype(io_dtype)

    # Fused layer-1 weights/biases of ffn_f | ffn_w; weights in io dtype for the
    # bf16 MXU fast path, biases stay f32 (added to the f32 accumulator).
    w1c = jnp.concatenate([w1f, w1w], axis=0).astype(io_dtype)     # (2C, C)
    b1c = jnp.concatenate([b1f, b1w], axis=0).reshape(2 * C, 1)    # (2C, 1) f32
    w2f_k = w2f.astype(io_dtype)
    w2w_k = w2w.astype(io_dtype)
    b2f_k = b2f.reshape(C, 1)
    b2w_k = b2w.reshape(C, 1)

    # reverse handled purely via DMA offsets (index_map), no jnp.flip passes
    def tmap(g):
        return (0, nb - 1 - g) if reverse else (0, g)

    cmap = lambda g: (0, 0)

    # VMEM budget: double-buffered in/out slabs + resident weights/state, with
    # headroom, clamped under ~48 MiB so the same kernel fits v7x's 64 MiB/TC.
    blk_bytes = tt * M * C * itemsize
    wgt_bytes = 4 * C * C * itemsize + 4 * C * 4
    state_bytes = 2 * C * M * 4
    vmem_limit = int(min(max(8 * blk_bytes + 4 * wgt_bytes + 2 * state_bytes,
                             16 << 20), 48 << 20))

    kern = functools.partial(_mab_rnn_kernel, tt=tt, m=M, c=C, reverse=reverse)

    out_flat, pool = pl.pallas_call(
        kern,
        out_shape=(jax.ShapeDtypeStruct((C, T * M), io_dtype),
                   jax.ShapeDtypeStruct((C, M), jnp.float32)),
        grid_spec=pltpu.PrefetchScalarGridSpec(
            num_scalar_prefetch=0,
            grid=(nb,),
            in_specs=[pl.BlockSpec((C, tt * M), tmap),
                      pl.BlockSpec((2 * C, C), cmap),       # fused w1
                      pl.BlockSpec((2 * C, 1), cmap),       # fused b1
                      pl.BlockSpec((C, C), cmap),           # w2 of ffn_f
                      pl.BlockSpec((C, 1), cmap),
                      pl.BlockSpec((C, C), cmap),           # w2 of ffn_w
                      pl.BlockSpec((C, 1), cmap)],
            out_specs=(pl.BlockSpec((C, tt * M), tmap),
                       pl.BlockSpec((C, M), cmap)),         # resident pool acc
            scratch_shapes=[pltpu.VMEM((C, M), jnp.float32)]),  # h carry (f32)
        compiler_params=pltpu.CompilerParams(
            dimension_semantics=("arbitrary",),              # sequential RNN
            vmem_limit_bytes=vmem_limit),
    )(xt, w1c, b1c, w2f_k, b2f_k, w2w_k, b2w_k)

    # Epilogue in plain XLA (fuses with the reshape/transpose): SCA is a tiny
    # (C,C)@(C,N) matmul + sigmoid + broadcast multiply; only done if enabled.
    out = out_flat.reshape(C, T, N, H, W).astype(jnp.float32)
    if enable_ca:
        mean = pool.reshape(C, N, H * W).sum(axis=-1) * (1.0 / (T * H * W))
        s = jax.nn.sigmoid(
            jnp.dot(wc, mean, precision=jax.lax.Precision.HIGHEST)
            + bc.reshape(C, 1))                              # (C, N)
        out = out * s[:, None, :, None, None]
    return jnp.transpose(out, (2, 0, 1, 3, 4))               # -> (N, C, T, H, W)


# -------------------------- params & reference ----------------------------- #
def init_params(key, C):
    """Conv3d(C, C, k=1) weights in PyTorch convention: (C_out, C_in), bias (C,)."""
    ks = jax.random.split(key, 10)
    def w(k): return jax.random.normal(k, (C, C), jnp.float32) * 0.3
    def b(k): return jax.random.normal(k, (C,), jnp.float32) * 0.1
    return (w(ks[0]), b(ks[1]), w(ks[2]), b(ks[3]),   # ffn_f: w1, b1, w2, b2
            w(ks[4]), b(ks[5]), w(ks[6]), b(ks[7]),   # ffn_w: w1, b1, w2, b2
            w(ks[8]), b(ks[9]))                       # sca:   wc, bc


def mab_reference(x, params, *, enable_ca=True, reverse=False):
    """Pure-JAX f32 re-implementation of the PyTorch forward for validation."""
    N, C, T, H, W = x.shape
    w1f, b1f, w2f, b2f, w1w, b1w, w2w, b2w, wc, bc = params
    xc = jnp.transpose(x, (0, 2, 3, 4, 1))                    # (N, T, H, W, C)
    hi = jax.lax.Precision.HIGHEST

    def conv(v, w, bb):
        return jnp.einsum('...i,oi->...o', v, w, precision=hi) + bb

    Z = jnp.tanh(conv(jnp.tanh(conv(xc, w1f, b1f)), w2f, b2f))
    Fg = jax.nn.sigmoid(conv(jnp.tanh(conv(xc, w1w, b1w)), w2w, b2w))
    h = jnp.zeros((N, H, W, C), jnp.float32)
    hs = [None] * T
    order = range(T - 1, -1, -1) if reverse else range(T)
    for t in order:
        h = Fg[:, t] * h + (1.0 - Fg[:, t]) * Z[:, t]
        hs[t] = h
    out = jnp.stack(hs, axis=1)                               # (N, T, H, W, C)
    if enable_ca:
        mean = out.mean(axis=(1, 2, 3))                       # (N, C)
        s = jax.nn.sigmoid(conv(mean, wc, bc))
        out = out * s[:, None, None, None, :]
    return jnp.transpose(out, (0, 4, 1, 2, 3))


# ---------------------------------- main ------------------------------------ #
if __name__ == "__main__":
    key = jax.random.PRNGKey(0)
    kx, kp = jax.random.split(key)
    N, C, T, H, W = 2, 4, 8, 8, 8          # N*H*W = 128 -> lane-dense blocks
    x = jax.random.normal(kx, (N, C, T, H, W), jnp.float32)
    params = init_params(kp, C)

    # 1) f32 I/O path (exact algorithm check), tt=2 exercises the cross-block
    #    hidden-state carry over a 4-step grid.
    ref = mab_reference(x, params, enable_ca=True, reverse=False)
    y32 = jax.block_until_ready(mab_forward(x, params, enable_ca=True,
                                            reverse=False,
                                            io_dtype=jnp.float32, tt=2))
    assert y32.shape == (N, C, T, H, W)
    if not jnp.allclose(y32, ref, rtol=5e-3, atol=5e-3):
        raise AssertionError("f32 Pallas MAB output mismatch vs JAX reference")

    # 2) bf16 HBM/MXU fast path (f32 accumulation); tolerance sized for the
    #    bf16 quantization of inputs/weights/output storage.
    ybf = jax.block_until_ready(mab_forward(x, params, enable_ca=True,
                                            reverse=False,
                                            io_dtype=jnp.bfloat16, tt=2))
    if not jnp.allclose(ybf, ref, rtol=3e-2, atol=3e-2):
        raise AssertionError("bf16 Pallas MAB output mismatch vs JAX reference")

    # 3) reverse direction (handled in the index_map) + channel attention off.
    ref_rev = mab_reference(x, params, enable_ca=False, reverse=True)
    yrev = jax.block_until_ready(mab_forward(x, params, enable_ca=False,
                                             reverse=True,
                                             io_dtype=jnp.bfloat16, tt=2))
    if not jnp.allclose(yrev, ref_rev, rtol=3e-2, atol=3e-2):
        raise AssertionError("bf16 reverse Pallas MAB output mismatch vs reference")

    print("KERNEL_OK")
</pallas_src>

<mosaic_0001>
module attributes {stable_mosaic.version = 11 : i64} {
  func.func @_mab_rnn_kernel(%arg0: i32, %arg1: memref<4x256xf32, #tpu.memory_space<vmem>>, %arg2: memref<8x4xf32, #tpu.memory_space<vmem>>, %arg3: memref<8x1xf32, #tpu.memory_space<vmem>>, %arg4: memref<4x4xf32, #tpu.memory_space<vmem>>, %arg5: memref<4x1xf32, #tpu.memory_space<vmem>>, %arg6: memref<4x4xf32, #tpu.memory_space<vmem>>, %arg7: memref<4x1xf32, #tpu.memory_space<vmem>>, %arg8: memref<4x256xf32, #tpu.memory_space<vmem>>, %arg9: memref<4x128xf32, #tpu.memory_space<vmem>>, %arg10: memref<4x128xf32, #tpu.memory_space<vmem>>) attributes {dimension_semantics = [#tpu.dimension_semantics<arbitrary>], iteration_bounds = array<i64: 4>, scalar_prefetch = 0 : i64, scratch_operands = 1 : i64, tpu.core_type = #tpu.core_type<tc>, window_params = [{transform_indices = @transform_0, window_bounds = array<i64: 4, 256>}, {pipeline_mode = #tpu.pipeline_mode<synchronous>, transform_indices = @transform_1, window_bounds = array<i64: 8, 4>}, {pipeline_mode = #tpu.pipeline_mode<synchronous>, transform_indices = @transform_2, window_bounds = array<i64: 8, 1>}, {pipeline_mode = #tpu.pipeline_mode<synchronous>, transform_indices = @transform_3, window_bounds = array<i64: 4, 4>}, {pipeline_mode = #tpu.pipeline_mode<synchronous>, transform_indices = @transform_4, window_bounds = array<i64: 4, 1>}, {pipeline_mode = #tpu.pipeline_mode<synchronous>, transform_indices = @transform_5, window_bounds = array<i64: 4, 4>}, {pipeline_mode = #tpu.pipeline_mode<synchronous>, transform_indices = @transform_6, window_bounds = array<i64: 4, 1>}, {transform_indices = @transform_7, window_bounds = array<i64: 4, 256>}, {pipeline_mode = #tpu.pipeline_mode<synchronous>, transform_indices = @transform_8, window_bounds = array<i64: 4, 128>}]} {
    %c0_i32 = arith.constant 0 : i32
    %0 = arith.cmpi eq, %arg0, %c0_i32 : i32
    %1 = arith.extui %0 : i1 to i32
    %c0_i32_0 = arith.constant 0 : i32
    %2 = arith.cmpi ne, %1, %c0_i32_0 : i32
    scf.if %2 {
      %cst_30 = arith.constant 0.000000e+00 : f32
      %50 = vector.broadcast %cst_30 : f32 to vector<4x128xf32>
      %c0_31 = arith.constant 0 : index
      %c0_32 = arith.constant 0 : index
      %51 = vector.load %arg10[%c0_31, %c0_32] : memref<4x128xf32, #tpu.memory_space<vmem>>, vector<4x128xf32>
      tpu.vector_store %arg10[%c0_31, %c0_32], %50 {strides = array<i32>} : memref<4x128xf32, #tpu.memory_space<vmem>>, vector<4x128xf32>,
      %cst_33 = arith.constant 0.000000e+00 : f32
      %52 = vector.broadcast %cst_33 : f32 to vector<4x128xf32>
      %c0_34 = arith.constant 0 : index
      %c0_35 = arith.constant 0 : index
      %53 = vector.load %arg9[%c0_34, %c0_35] : memref<4x128xf32, #tpu.memory_space<vmem>>, vector<4x128xf32>
      tpu.vector_store %arg9[%c0_34, %c0_35], %52 {strides = array<i32>} : memref<4x128xf32, #tpu.memory_space<vmem>>, vector<4x128xf32>,
    } else {
    }
    %c0 = arith.constant 0 : index
    %c0_1 = arith.constant 0 : index
    %3 = vector.load %arg1[%c0, %c0_1] : memref<4x256xf32, #tpu.memory_space<vmem>>, vector<4x256xf32>
    %c0_2 = arith.constant 0 : index
    %c0_3 = arith.constant 0 : index
    %4 = vector.load %arg2[%c0_2, %c0_3] : memref<8x4xf32, #tpu.memory_space<vmem>>, vector<8x4xf32>
    %cst = arith.constant dense<0.000000e+00> : vector<8x256xf32>
    %5 = tpu.matmul %4, %3, %cst {dimension_numbers = #tpu.dot_dimension_numbers<[1], [0], [0], [1], [0, 0, 1, 1], [], []>} : vector<8x4xf32>, vector<4x256xf32>, vector<8x256xf32> -> vector<8x256xf32>
    %c0_4 = arith.constant 0 : index
    %c0_5 = arith.constant 0 : index
    %6 = vector.load %arg3[%c0_4, %c0_5] : memref<8x1xf32, #tpu.memory_space<vmem>>, vector<8x1xf32>
    %7 = vector.broadcast %6 : vector<8x1xf32> to vector<8x256xf32>
    %8 = arith.addf %5, %7 : vector<8x256xf32>
    %9 = math.tanh %8 : vector<8x256xf32>
    %c0_6 = arith.constant 0 : index
    %c0_7 = arith.constant 0 : index
    %10 = vector.load %arg4[%c0_6, %c0_7] : memref<4x4xf32, #tpu.memory_space<vmem>>, vector<4x4xf32>
    %11 = vector.extract_strided_slice %9 {offsets = [0, 0], sizes = [4, 256], strides = [1, 1]} : vector<8x256xf32> to vector<4x256xf32>
    %cst_8 = arith.constant dense<0.000000e+00> : vector<4x256xf32>
    %12 = tpu.matmul %10, %11, %cst_8 {dimension_numbers = #tpu.dot_dimension_numbers<[1], [0], [0], [1], [0, 0, 1, 1], [], []>} : vector<4x4xf32>, vector<4x256xf32>, vector<4x256xf32> -> vector<4x256xf32>
    %c0_9 = arith.constant 0 : index
    %c0_10 = arith.constant 0 : index
    %13 = vector.load %arg5[%c0_9, %c0_10] : memref<4x1xf32, #tpu.memory_space<vmem>>, vector<4x1xf32>
    %14 = vector.broadcast %13 : vector<4x1xf32> to vector<4x256xf32>
    %15 = arith.addf %12, %14 : vector<4x256xf32>
    %16 = math.tanh %15 : vector<4x256xf32>
    %c0_11 = arith.constant 0 : index
    %c0_12 = arith.constant 0 : index
    %17 = vector.load %arg6[%c0_11, %c0_12] : memref<4x4xf32, #tpu.memory_space<vmem>>, vector<4x4xf32>
    %18 = vector.extract_strided_slice %9 {offsets = [4, 0], sizes = [4, 256], strides = [1, 1]} : vector<8x256xf32> to vector<4x256xf32>
    %cst_13 = arith.constant dense<0.000000e+00> : vector<4x256xf32>
    %19 = tpu.matmul %17, %18, %cst_13 {dimension_numbers = #tpu.dot_dimension_numbers<[1], [0], [0], [1], [0, 0, 1, 1], [], []>} : vector<4x4xf32>, vector<4x256xf32>, vector<4x256xf32> -> vector<4x256xf32>
    %c0_14 = arith.constant 0 : index
    %c0_15 = arith.constant 0 : index
    %20 = vector.load %arg7[%c0_14, %c0_15] : memref<4x1xf32, #tpu.memory_space<vmem>>, vector<4x1xf32>
    %21 = vector.broadcast %20 : vector<4x1xf32> to vector<4x256xf32>
    %22 = arith.addf %19, %21 : vector<4x256xf32>
    %23 = arith.negf %22 : vector<4x256xf32>
    %24 = math.exp %23 : vector<4x256xf32>
    %cst_16 = arith.constant 1.000000e+00 : f32
    %25 = vector.broadcast %cst_16 : f32 to vector<4x256xf32>
    %26 = arith.addf %25, %24 : vector<4x256xf32>
    %27 = arith.divf %25, %26 : vector<4x256xf32>
    %c0_17 = arith.constant 0 : index
    %c0_18 = arith.constant 0 : index
    %28 = vector.load %arg10[%c0_17, %c0_18] : memref<4x128xf32, #tpu.memory_space<vmem>>, vector<4x128xf32>
    %c0_19 = arith.constant 0 : index
    %c0_20 = arith.constant 0 : index
    %29 = vector.load %arg9[%c0_19, %c0_20] : memref<4x128xf32, #tpu.memory_space<vmem>>, vector<4x128xf32>
    %30 = vector.extract_strided_slice %27 {offsets = [0, 0], sizes = [4, 128], strides = [1, 1]} : vector<4x256xf32> to vector<4x128xf32>
    %31 = vector.extract_strided_slice %16 {offsets = [0, 0], sizes = [4, 128], strides = [1, 1]} : vector<4x256xf32> to vector<4x128xf32>
    %32 = arith.mulf %30, %28 : vector<4x128xf32>
    %cst_21 = arith.constant 1.000000e+00 : f32
    %33 = vector.broadcast %cst_21 : f32 to vector<4x128xf32>
    %34 = arith.subf %33, %30 : vector<4x128xf32>
    %35 = arith.mulf %34, %31 : vector<4x128xf32>
    %36 = arith.addf %32, %35 : vector<4x128xf32>
    %37 = arith.addf %29, %36 : vector<4x128xf32>
    %c0_22 = arith.constant 0 : index
    %c0_23 = arith.constant 0 : index
    %38 = vector.load %arg8[%c0_22, %c0_23] : memref<4x256xf32, #tpu.memory_space<vmem>>, vector<4x128xf32>
    tpu.vector_store %arg8[%c0_22, %c0_23], %36 {strides = array<i32>} : memref<4x256xf32, #tpu.memory_space<vmem>>, vector<4x128xf32>,
    %39 = vector.extract_strided_slice %27 {offsets = [0, 128], sizes = [4, 128], strides = [1, 1]} : vector<4x256xf32> to vector<4x128xf32>
    %40 = vector.extract_strided_slice %16 {offsets = [0, 128], sizes = [4, 128], strides = [1, 1]} : vector<4x256xf32> to vector<4x128xf32>
    %41 = arith.mulf %39, %36 : vector<4x128xf32>
    %cst_24 = arith.constant 1.000000e+00 : f32
    %42 = vector.broadcast %cst_24 : f32 to vector<4x128xf32>
    %43 = arith.subf %42, %39 : vector<4x128xf32>
    %44 = arith.mulf %43, %40 : vector<4x128xf32>
    %45 = arith.addf %41, %44 : vector<4x128xf32>
    %46 = arith.addf %37, %45 : vector<4x128xf32>
    %c0_25 = arith.constant 0 : index
    %c128 = arith.constant 128 : index
    %47 = vector.load %arg8[%c0_25, %c128] : memref<4x256xf32, #tpu.memory_space<vmem>>, vector<4x128xf32>
    tpu.vector_store %arg8[%c0_25, %c128], %45 {strides = array<i32>} : memref<4x256xf32, #tpu.memory_space<vmem>>, vector<4x128xf32>,
    %c0_26 = arith.constant 0 : index
    %c0_27 = arith.constant 0 : index
    %48 = vector.load %arg10[%c0_26, %c0_27] : memref<4x128xf32, #tpu.memory_space<vmem>>, vector<4x128xf32>
    tpu.vector_store %arg10[%c0_26, %c0_27], %45 {strides = array<i32>} : memref<4x128xf32, #tpu.memory_space<vmem>>, vector<4x128xf32>,
    %c0_28 = arith.constant 0 : index
    %c0_29 = arith.constant 0 : index
    %49 = vector.load %arg9[%c0_28, %c0_29] : memref<4x128xf32, #tpu.memory_space<vmem>>, vector<4x128xf32>
    tpu.vector_store %arg9[%c0_28, %c0_29], %46 {strides = array<i32>} : memref<4x128xf32, #tpu.memory_space<vmem>>, vector<4x128xf32>,
    return
  }
  func.func @transform_0(%arg0: i32) -> (i32, i32) {
    %c0_i32 = arith.constant 0 : i32
    %c0_i32_0 = arith.constant 0 : i32
    return %c0_i32, %arg0 : i32, i32
  }
  func.func @transform_1(%arg0: i32) -> (i32, i32) {
    %c0_i32 = arith.constant 0 : i32
    %c0_i32_0 = arith.constant 0 : i32
    %c0_i32_1 = arith.constant 0 : i32
    return %c0_i32, %c0_i32_0 : i32, i32
  }
  func.func @transform_2(%arg0: i32) -> (i32, i32) {
    %c0_i32 = arith.constant 0 : i32
    %c0_i32_0 = arith.constant 0 : i32
    %c0_i32_1 = arith.constant 0 : i32
    return %c0_i32, %c0_i32_0 : i32, i32
  }
  func.func @transform_3(%arg0: i32) -> (i32, i32) {
    %c0_i32 = arith.constant 0 : i32
    %c0_i32_0 = arith.constant 0 : i32
    %c0_i32_1 = arith.constant 0 : i32
    return %c0_i32, %c0_i32_0 : i32, i32
  }
  func.func @transform_4(%arg0: i32) -> (i32, i32) {
    %c0_i32 = arith.constant 0 : i32
    %c0_i32_0 = arith.constant 0 : i32
    %c0_i32_1 = arith.constant 0 : i32
    return %c0_i32, %c0_i32_0 : i32, i32
  }
  func.func @transform_5(%arg0: i32) -> (i32, i32) {
    %c0_i32 = arith.constant 0 : i32
    %c0_i32_0 = arith.constant 0 : i32
    %c0_i32_1 = arith.constant 0 : i32
    return %c0_i32, %c0_i32_0 : i32, i32
  }
  func.func @transform_6(%arg0: i32) -> (i32, i32) {
    %c0_i32 = arith.constant 0 : i32
    %c0_i32_0 = arith.constant 0 : i32
    %c0_i32_1 = arith.constant 0 : i32
    return %c0_i32, %c0_i32_0 : i32, i32
  }
  func.func @transform_7(%arg0: i32) -> (i32, i32) {
    %c0_i32 = arith.constant 0 : i32
    %c0_i32_0 = arith.constant 0 : i32
    return %c0_i32, %arg0 : i32, i32
  }
  func.func @transform_8(%arg0: i32) -> (i32, i32) {
    %c0_i32 = arith.constant 0 : i32
    %c0_i32_0 = arith.constant 0 : i32
    %c0_i32_1 = arith.constant 0 : i32
    return %c0_i32, %c0_i32_0 : i32, i32
  }
}

</mosaic_0001>

<llo_original>
// kernel: tpu_custom_call.1
$region0: #{tpu_custom_call.1}
  #allocation0 [shape = 'u32[]', space=smem, size = 0x4, offset = 0x4, fixed_abs, tag = 'smem constant byte address 0x4 - core index']
  #allocation1 [shape = 'u32[72,128]{1,0:T(1,128)}', space=vmem, size = 0x9000, scoped, tag = 'internal scratch']
  #allocation2 [shape = 'f32[4,128]{1,0:T(4,128)}', space=vmem, size = 0x800, scoped, tag = 'scratch operand']
  %s0 = inlined_call_operand.hbm [shape: f32[4,1024], index: 0, kind: input, shape index: {}]
  %s1 = inlined_call_operand.vmem [shape: f32[8,4], index: 1, kind: input, shape index: {}]
  %s2 = inlined_call_operand.vmem [shape: f32[8,1], index: 2, kind: input, shape index: {}]
  %s3 = inlined_call_operand.vmem [shape: f32[4,4], index: 3, kind: input, shape index: {}]
  %s4 = inlined_call_operand.vmem [shape: f32[4,1], index: 4, kind: input, shape index: {}]
  %s5 = inlined_call_operand.vmem [shape: f32[4,4], index: 5, kind: input, shape index: {}]
  %s6 = inlined_call_operand.vmem [shape: f32[4,1], index: 6, kind: input, shape index: {}]
  %s7 = inlined_call_operand.hbm [shape: f32[4,1024], index: 7, kind: output, shape index: {0}]
  %s8 = inlined_call_operand.hbm [shape: f32[4,128], index: 8, kind: output, shape index: {1}]
  %9 = xla_tuple %s7, %s8
  %s10 = sld [smem:[#allocation0]]
  $region77: #{tpu_custom_call.1} parent=0
    _
  %s12 = ssub.s32 1, %s10
  %s13 = scalar_select 0, %s12, %s10
  $region1: #{tpu_custom_call.1} parent=0
    #allocation3 [shape = 'u8[8192]{0}', space=vmem, size = 0x2000, scoped, tag = 'input window, operand 0']
    #allocation4 [shape = 's32[2]{0}', space=sflag, size = 0x8, scoped, tag = 'scoped memory for tpu_custom_call.1']
    #allocation5 [shape = 's32[2]{0}', space=sflag, size = 0x8, scoped, tag = 'scoped memory for tpu_custom_call.1']
    #allocation6 [shape = 'u8[8192]{0}', space=vmem, size = 0x2000, scoped, tag = 'output window, operand 0']
    #allocation7 [shape = 'u8[2048]{0}', space=vmem, size = 0x800, scoped, tag = 'output window, operand 1, single buffered']
    #allocation8 [shape = 's32[1]{0}', space=sflag, size = 0x4, scoped, tag = 'scoped memory for tpu_custom_call.1']
    %14 = vsyncpa [#allocation4], 0
    %s15 = scalar_lea.sflag [#allocation4], 1
    %16 = vsyncpa %s15, 0
    %17 = vsyncpa [#allocation5], 0
    %s18 = scalar_lea.sflag [#allocation5], 1
    %19 = vsyncpa %s18, 0
    %20 = vsyncpa [#allocation8], 0
    loop: start=0, step=1, limit=6
    $region2: #{tpu_custom_call.1} parent=1 // loop_pre_header
      _
    $region3: #{tpu_custom_call.1} parent=1 // loop_header
      %s22 = sphi 0, %s26
      %p23 = scmp.ge.s32.totalorder %s22, 6
      %s32 = sphi 0, %s34
      %s35 = sphi 0, %s32
      %s36 = sphi 0, %s35
      %s52 = sphi 0, %s36
      %s56 = sphi 0, %s56
      %s58 = sphi 0, %s56
      %s59 = sphi 0, %s58
      %s73 = sphi 0, %s59
      %s77 = sphi 0, %s77
      %s79 = sphi 0, %s77
      %s80 = sphi 0, %s79
      %s94 = sphi 0, %s80
      %s98 = sphi 0, %s98
      %s100 = sphi 0, %s98
      %s101 = sphi 0, %s100
      %s115 = sphi 0, %s101
      %s119 = sphi 0, %s119
      %s121 = sphi 0, %s119
      %s122 = sphi 0, %s121
      %s136 = sphi 0, %s122
      %s140 = sphi 0, %s140
      %s142 = sphi 0, %s140
      %s143 = sphi 0, %s142
      %s157 = sphi 0, %s143
      %s161 = sphi 0, %s161
      %s163 = sphi 0, %s161
      %s164 = sphi 0, %s163
      %s178 = sphi 0, %s164
      %s184 = sphi 0, %s186
      %s187 = sphi 0, %s184
      %s188 = sphi 0, %s187
      %s204 = sphi 0, %s188
      %s208 = sphi 0, %s208
      %s210 = sphi 0, %s208
      %s211 = sphi 0, %s210
      %s225 = sphi 0, %s211
    $region4: #{tpu_custom_call.1} parent=1 // loop_header_branch
      %25 = sbr.rel (%p23) target = $region8
    $region5: #{tpu_custom_call.1} parent=1 // loop_body
      %s27 = ssub.s32 %s22, 1
      %s28 = ssub.s32 %s22, 2
      %s29 = sadd.s32 %s22, 1
      %s30 = ssub.s32 %s22, %s29
      %p31 = scmp.eq.s32.totalorder %s30, 0
      %s33 = sadd.s32 %s32, 1
      %s34 = scalar_select %p31, %s32, %s33
      %p37 = pneg %p31
      %p38 = scmp.eq.s32.totalorder %s22, 3
      %p39 = por %p37, %p38
      %p40 = scmp.ne.s32.totalorder %s32, %s35
      %p41 = scmp.eq.s32.totalorder %s22, 0
      %p42 = por %p40, %p41
      %p43 = scmp.ne.s32.totalorder %s32, %s35
      %p44 = scmp.eq.s32.totalorder %s27, 3
      %p45 = por %p43, %p44
      %p46 = scmp.ne.s32.totalorder %s35, %s36
      %p47 = scmp.eq.s32.totalorder %s27, 0
      %p48 = por %p46, %p47
      %p49 = scmp.ne.s32.totalorder %s35, %s36
      %p50 = scmp.eq.s32.totalorder %s28, 3
      %p51 = por %p49, %p50
      %p53 = scmp.ne.s32.totalorder %s36, %s52
      %p54 = scmp.eq.s32.totalorder %s28, 0
      %p55 = por %p53, %p54
      %s57 = sadd.s32 %s56, 1
      %p60 = scmp.eq.s32.totalorder %s22, 3
      %p61 = scmp.ne.s32.totalorder %s56, %s58
      %p62 = scmp.eq.s32.totalorder %s22, 0
      %p63 = por %p61, %p62
      %p64 = scmp.ne.s32.totalorder %s56, %s58
      %p65 = scmp.eq.s32.totalorder %s27, 3
      %p66 = por %p64, %p65
      %p67 = scmp.ne.s32.totalorder %s58, %s59
      %p68 = scmp.eq.s32.totalorder %s27, 0
      %p69 = por %p67, %p68
      %p70 = scmp.ne.s32.totalorder %s58, %s59
      %p71 = scmp.eq.s32.totalorder %s28, 3
      %p72 = por %p70, %p71
      %p74 = scmp.ne.s32.totalorder %s59, %s73
      %p75 = scmp.eq.s32.totalorder %s28, 0
      %p76 = por %p74, %p75
      %s78 = sadd.s32 %s77, 1
      %p81 = scmp.eq.s32.totalorder %s22, 3
      %p82 = scmp.ne.s32.totalorder %s77, %s79
      %p83 = scmp.eq.s32.totalorder %s22, 0
      %p84 = por %p82, %p83
      %p85 = scmp.ne.s32.totalorder %s77, %s79
      %p86 = scmp.eq.s32.totalorder %s27, 3
      %p87 = por %p85, %p86
      %p88 = scmp.ne.s32.totalorder %s79, %s80
      %p89 = scmp.eq.s32.totalorder %s27, 0
      %p90 = por %p88, %p89
      %p91 = scmp.ne.s32.totalorder %s79, %s80
      %p92 = scmp.eq.s32.totalorder %s28, 3
      %p93 = por %p91, %p92
      %p95 = scmp.ne.s32.totalorder %s80, %s94
      %p96 = scmp.eq.s32.totalorder %s28, 0
      %p97 = por %p95, %p96
      %s99 = sadd.s32 %s98, 1
      %p102 = scmp.eq.s32.totalorder %s22, 3
      %p103 = scmp.ne.s32.totalorder %s98, %s100
      %p104 = scmp.eq.s32.totalorder %s22, 0
      %p105 = por %p103, %p104
      %p106 = scmp.ne.s32.totalorder %s98, %s100
      %p107 = scmp.eq.s32.totalorder %s27, 3
      %p108 = por %p106, %p107
      %p109 = scmp.ne.s32.totalorder %s100, %s101
      %p110 = scmp.eq.s32.totalorder %s27, 0
      %p111 = por %p109, %p110
      %p112 = scmp.ne.s32.totalorder %s100, %s101
      %p113 = scmp.eq.s32.totalorder %s28, 3
      %p114 = por %p112, %p113
      %p116 = scmp.ne.s32.totalorder %s101, %s115
      %p117 = scmp.eq.s32.totalorder %s28, 0
      %p118 = por %p116, %p117
      %s120 = sadd.s32 %s119, 1
      %p123 = scmp.eq.s32.totalorder %s22, 3
      %p124 = scmp.ne.s32.totalorder %s119, %s121
      %p125 = scmp.eq.s32.totalorder %s22, 0
      %p126 = por %p124, %p125
      %p127 = scmp.ne.s32.totalorder %s119, %s121
      %p128 = scmp.eq.s32.totalorder %s27, 3
      %p129 = por %p127, %p128
      %p130 = scmp.ne.s32.totalorder %s121, %s122
      %p131 = scmp.eq.s32.totalorder %s27, 0
      %p132 = por %p130, %p131
      %p133 = scmp.ne.s32.totalorder %s121, %s122
      %p134 = scmp.eq.s32.totalorder %s28, 3
      %p135 = por %p133, %p134
      %p137 = scmp.ne.s32.totalorder %s122, %s136
      %p138 = scmp.eq.s32.totalorder %s28, 0
      %p139 = por %p137, %p138
      %s141 = sadd.s32 %s140, 1
      %p144 = scmp.eq.s32.totalorder %s22, 3
      %p145 = scmp.ne.s32.totalorder %s140, %s142
      %p146 = scmp.eq.s32.totalorder %s22, 0
      %p147 = por %p145, %p146
      %p148 = scmp.ne.s32.totalorder %s140, %s142
      %p149 = scmp.eq.s32.totalorder %s27, 3
      %p150 = por %p148, %p149
      %p151 = scmp.ne.s32.totalorder %s142, %s143
      %p152 = scmp.eq.s32.totalorder %s27, 0
      %p153 = por %p151, %p152
      %p154 = scmp.ne.s32.totalorder %s142, %s143
      %p155 = scmp.eq.s32.totalorder %s28, 3
      %p156 = por %p154, %p155
      %p158 = scmp.ne.s32.totalorder %s143, %s157
      %p159 = scmp.eq.s32.totalorder %s28, 0
      %p160 = por %p158, %p159
      %s162 = sadd.s32 %s161, 1
      %p165 = scmp.eq.s32.totalorder %s22, 3
      %p166 = scmp.ne.s32.totalorder %s161, %s163
      %p167 = scmp.eq.s32.totalorder %s22, 0
      %p168 = por %p166, %p167
      %p169 = scmp.ne.s32.totalorder %s161, %s163
      %p170 = scmp.eq.s32.totalorder %s27, 3
      %p171 = por %p169, %p170
      %p172 = scmp.ne.s32.totalorder %s163, %s164
      %p173 = scmp.eq.s32.totalorder %s27, 0
      %p174 = por %p172, %p173
      %p175 = scmp.ne.s32.totalorder %s163, %s164
      %p176 = scmp.eq.s32.totalorder %s28, 3
      %p177 = por %p175, %p176
      %p179 = scmp.ne.s32.totalorder %s164, %s178
      %p180 = scmp.eq.s32.totalorder %s28, 0
      %p181 = por %p179, %p180
      %s182 = ssub.s32 %s22, %s29
      %p183 = scmp.eq.s32.totalorder %s182, 0
      %s185 = sadd.s32 %s184, 1
      %s186 = scalar_select %p183, %s184, %s185
      %p189 = pneg %p183
      %p190 = scmp.eq.s32.totalorder %s22, 3
      %p191 = por %p189, %p190
      %p192 = scmp.ne.s32.totalorder %s184, %s187
      %p193 = scmp.eq.s32.totalorder %s22, 0
      %p194 = por %p192, %p193
      %p195 = scmp.ne.s32.totalorder %s184, %s187
      %p196 = scmp.eq.s32.totalorder %s27, 3
      %p197 = por %p195, %p196
      %p198 = scmp.ne.s32.totalorder %s187, %s188
      %p199 = scmp.eq.s32.totalorder %s27, 0
      %p200 = por %p198, %p199
      %p201 = scmp.ne.s32.totalorder %s187, %s188
      %p202 = scmp.eq.s32.totalorder %s28, 3
      %p203 = por %p201, %p202
      %p205 = scmp.ne.s32.totalorder %s188, %s204
      %p206 = scmp.eq.s32.totalorder %s28, 0
      %p207 = por %p205, %p206
      %s209 = sadd.s32 %s208, 1
      %p212 = scmp.eq.s32.totalorder %s22, 3
      %p213 = scmp.ne.s32.totalorder %s208, %s210
      %p214 = scmp.eq.s32.totalorder %s22, 0
      %p215 = por %p213, %p214
      %p216 = scmp.ne.s32.totalorder %s208, %s210
      %p217 = scmp.eq.s32.totalorder %s27, 3
      %p218 = por %p216, %p217
      %p219 = scmp.ne.s32.totalorder %s210, %s211
      %p220 = scmp.eq.s32.totalorder %s27, 0
      %p221 = por %p219, %p220
      %p222 = scmp.ne.s32.totalorder %s210, %s211
      %p223 = scmp.eq.s32.totalorder %s28, 3
      %p224 = por %p222, %p223
      %p226 = scmp.ne.s32.totalorder %s211, %s225
      %p227 = scmp.eq.s32.totalorder %s28, 0
      %p228 = por %p226, %p227
      %p229 = scmp.le.s32.totalorder 1, %s22
      %p230 = scmp.lt.s32.totalorder %s22, 5
      %p231 = pnand %p229, %p230
      %p232 = pneg %p231
      // Predicated region
      $region9: #{tpu_custom_call.1} parent=5 // pred_check
        _
      $region10: #{tpu_custom_call.1} parent=5 // pred_check_branch
        %234 = sbr.rel (%p231) target = $region12
      $region11: #{tpu_custom_call.1} parent=5 // pred_region
        %s235 = ssub.s32 %s22, 1
        // Predicated region
        $region13: #{tpu_custom_call.1} parent=11 // pred_check
          %p236 = pneg %p69
        $region14: #{tpu_custom_call.1} parent=11 // pred_check_branch
          %238 = sbr.rel (%p236) target = $region16
        $region15: #{tpu_custom_call.1} parent=11 // pred_region
          _
        $region16: #{tpu_custom_call.1} parent=11 // pred_fallthru
          _
        // Predicated region
        $region17: #{tpu_custom_call.1} parent=11 // pred_check
          %p239 = pneg %p90
        $region18: #{tpu_custom_call.1} parent=11 // pred_check_branch
          %241 = sbr.rel (%p239) target = $region20
        $region19: #{tpu_custom_call.1} parent=11 // pred_region
          _
        $region20: #{tpu_custom_call.1} parent=11 // pred_fallthru
          _
        // Predicated region
        $region21: #{tpu_custom_call.1} parent=11 // pred_check
          %p242 = pneg %p111
        $region22: #{tpu_custom_call.1} parent=11 // pred_check_branch
          %244 = sbr.rel (%p242) target = $region24
        $region23: #{tpu_custom_call.1} parent=11 // pred_region
          _
        $region24: #{tpu_custom_call.1} parent=11 // pred_fallthru
          _
        // Predicated region
        $region25: #{tpu_custom_call.1} parent=11 // pred_check
          %p245 = pneg %p132
        $region26: #{tpu_custom_call.1} parent=11 // pred_check_branch
          %247 = sbr.rel (%p245) target = $region28
        $region27: #{tpu_custom_call.1} parent=11 // pred_region
          _
        $region28: #{tpu_custom_call.1} parent=11 // pred_fallthru
          _
        // Predicated region
        $region29: #{tpu_custom_call.1} parent=11 // pred_check
          %p248 = pneg %p153
        $region30: #{tpu_custom_call.1} parent=11 // pred_check_branch
          %250 = sbr.rel (%p248) target = $region32
        $region31: #{tpu_custom_call.1} parent=11 // pred_region
          _
        $region32: #{tpu_custom_call.1} parent=11 // pred_fallthru
          _
        // Predicated region
        $region33: #{tpu_custom_call.1} parent=11 // pred_check
          %p251 = pneg %p174
        $region34: #{tpu_custom_call.1} parent=11 // pred_check_branch
          %253 = sbr.rel (%p251) target = $region36
        $region35: #{tpu_custom_call.1} parent=11 // pred_region
          _
        $region36: #{tpu_custom_call.1} parent=11 // pred_fallthru
          _
      $region12: #{tpu_custom_call.1} parent=5 // pred_fallthru
        _
      %p254 = scmp.lt.s32.totalorder %s22, 4
      // Predicated region
      $region37: #{tpu_custom_call.1} parent=5 // pred_check
        %p255 = pneg %p254
      $region38: #{tpu_custom_call.1} parent=5 // pred_check_branch
        %257 = sbr.rel (%p255) target = $region40
      $region39: #{tpu_custom_call.1} parent=5 // pred_region
        // Predicated region
        $region41: #{tpu_custom_call.1} parent=39 // pred_check
          %p258 = pneg %p42
        $region42: #{tpu_custom_call.1} parent=39 // pred_check_branch
          %260 = sbr.rel (%p258) target = $region44
        $region43: #{tpu_custom_call.1} parent=39 // pred_region
          %s261 = sand.u32 %s32, 1
          %s262 = scalar_lea.sflag [#allocation4], %s261
          %s263 = sand.u32 %s32, 1
          %s264 = smul.addr %s263, 8
          %s265 = scalar_lea.vmem [#allocation3], %s264
          %s266 = smul.u32 2, %s22
          %268 = vsyncadd %s262, 0
          %s269 = smul.addr %s266, 4
          %s270 = scalar_lea.hbm %s0, %s269
          %s272 = sshll.u32 %s270, 4
          %s273 = int_to_ptr.hbm [resolvable:$true] %s272
          %s274 = sshll.u32 %s265, 4
          %s275 = int_to_ptr.vmem [resolvable:$true] %s274
          %277 = dma.hbm_to_vmem [thread:$0]  %s273, 128, %s275, %s262
        $region44: #{tpu_custom_call.1} parent=39 // pred_fallthru
          _
      $region40: #{tpu_custom_call.1} parent=5 // pred_fallthru
        _
      %p278 = scmp.le.s32.totalorder 1, %s22
      %p279 = scmp.lt.s32.totalorder %s22, 5
      %p280 = pnand %p278, %p279
      %p281 = pneg %p280
      // Predicated region
      $region45: #{tpu_custom_call.1} parent=5 // pred_check
        _
      $region46: #{tpu_custom_call.1} parent=5 // pred_check_branch
        %283 = sbr.rel (%p280) target = $region48
      $region47: #{tpu_custom_call.1} parent=5 // pred_region
        %s284 = ssub.s32 %s22, 1
        %s285 = sand.u32 %s35, 1
        %s286 = scalar_lea.sflag [#allocation4], %s285
        %s287 = sand.u32 %s35, 1
        %s288 = smul.addr %s287, 8
        %s289 = scalar_lea.vmem [#allocation3], %s288
        // Predicated region
        $region49: #{tpu_custom_call.1} parent=47 // pred_check
          %p290 = pneg %p48
        $region50: #{tpu_custom_call.1} parent=47 // pred_check_branch
          %292 = sbr.rel (%p290) target = $region52
        $region51: #{tpu_custom_call.1} parent=47 // pred_region
          %294 = dma.done %s286, 128
        $region52: #{tpu_custom_call.1} parent=47 // pred_fallthru
          _
        %s295 = sand.u32 %s35, 1
        %s296 = scalar_lea.sflag [#allocation4], %s295
        %s297 = sand.u32 %s35, 1
        %s298 = smul.addr %s297, 8
        %s299 = scalar_lea.vmem [#allocation3], %s298
        %p300 = pneg %p48
        %p301 = pneg %p45
        %p302 = pneg %p69
        %p303 = pneg %p66
        %p304 = pneg %p90
        %p305 = pneg %p87
        %p306 = pneg %p111
        %p307 = pneg %p108
        %p308 = pneg %p132
        %p309 = pneg %p129
        %p310 = pneg %p153
        %p311 = pneg %p150
        %p312 = pneg %p174
        %p313 = pneg %p171
        %p314 = pneg %p200
        %p315 = pneg %p197
        %s316 = sand.u32 %s187, 1
        %s317 = scalar_lea.sflag [#allocation5], %s316
        %s318 = sand.u32 %s187, 1
        %s319 = smul.addr %s318, 8
        %s320 = scalar_lea.vmem [#allocation6], %s319
        %p321 = pneg %p221
        %p322 = pneg %p218
        %s323 = smul.u32 2, %s27
        %s324 = smul.u32 2, %s27
        %p325 = scmp.eq.s32.totalorder %s27, 0
        // Predicated region
        $region53: #{tpu_custom_call.1} parent=47 // pred_check
          %p326 = pneg %p325
        $region54: #{tpu_custom_call.1} parent=47 // pred_check_branch
          %328 = sbr.rel (%p326) target = $region56
        $region55: #{tpu_custom_call.1} parent=47 // pred_region
          %329 = vst [vmem:[#allocation2] sm:$0xf] 0.0
          %330 = vst [vmem:[#allocation7] sm:$0xf] 0.0
        $region56: #{tpu_custom_call.1} parent=47 // pred_fallthru
          _
        %v331 = vld [vmem:[%s289] sm:$0xff]
        %v332 = vld [vmem:[%s1] sm:$0xff]
        %v333 = vld [vmem:[%s2] sm:$0xff]
        %335 = vset.pattern.permute.xlu0 0
        %336 = vperm.xlu0 %335, %v333
        %v337 = vpop.permute.xlu0 %336
        %340 = vst [vmem:[#allocation1] ss:$2 sm:$0xff] %v331
        %v341 = vld.sshfl [vmem:[#allocation1] sm:$0xff pattern:$0x75316420]
        %v342 = vld.sshfl [vmem:[#allocation1 + $0x8] sm:$0xff pattern:$0x75316420]
        %vm343 = vcmask 31744
        %v345 = vsel %vm343, %v332, 0
        %vm347 = vcmask 1043456
        %v348 = vsel %vm347, %v341, 0
        %v350 = vsel %vm347, %v342, 0
        %352 = vmatpush.msra.mxu0 0.0
        %353 = vmatpush.msra.mxu0 0.0
        %354 = vmatpush.msra.mxu0 0.0
        %355 = vmatpush.msra.mxu0 0.0
        %356 = vmatpush.msra.mxu0 0.0
        %357 = vmatpush.msra.mxu0 0.0
        %358 = vmatpush.msra.mxu0 0.0
        %359 = vmatpush.msra.mxu0 0.0
        %360 = vmatpush.msra.mxu0 0.0
        %361 = vmatpush.msra.mxu0 0.0
        %362 = vmatpush.msra.mxu0 0.0
        %363 = vmatpush.msra.mxu0 0.0
        %364 = vmatpush.msra.mxu0 0.0
        %365 = vmatpush.msra.mxu0 0.0
        %366 = vmatpush.msra.mxu0 0.0
        %367 = vmatpush.msra.mxu0 %v348
        %368 = vmatmul.f32.gmra.mxu0 %v345
        %v369 = vpop.f32.mrf.mxu0
        %v370 = vadd.f32 %v337, %v369
        %371 = vdwg.mxu0
        %372 = vmatpush.msra.mxu0 0.0
        %373 = vmatpush.msra.mxu0 0.0
        %374 = vmatpush.msra.mxu0 0.0
        %375 = vmatpush.msra.mxu0 0.0
        %376 = vmatpush.msra.mxu0 0.0
        %377 = vmatpush.msra.mxu0 0.0
        %378 = vmatpush.msra.mxu0 0.0
        %379 = vmatpush.msra.mxu0 0.0
        %380 = vmatpush.msra.mxu0 0.0
        %381 = vmatpush.msra.mxu0 0.0
        %382 = vmatpush.msra.mxu0 0.0
        %383 = vmatpush.msra.mxu0 0.0
        %384 = vmatpush.msra.mxu0 0.0
        %385 = vmatpush.msra.mxu0 0.0
        %386 = vmatpush.msra.mxu0 0.0
        %387 = vmatpush.msra.mxu0 %v350
        %388 = vmatmul.f32.gmra.mxu0 %v345
        %v389 = vpop.f32.mrf.mxu0
        %v390 = vadd.f32 %v337, %v389
        %391 = vdwg.mxu0
        %v392 = vtanh.pop %v370
        %v393 = vtanh.pop %v390
        %v394 = vld [vmem:[%s3] sm:$0xf]
        %v395 = vld [vmem:[%s4] sm:$0xf]
        %397 = vset.pattern.permute.xlu0 0
        %398 = vperm.xlu0 %397, %v395
        %v399 = vpop.permute.xlu0 %398
        %v402 = vsel %vm343, %v394, 0
        %v405 = vsel %vm347, %v392, 0
        %v408 = vsel %vm347, %v393, 0
        %410 = vmatpush.msra.mxu0 0.0
        %411 = vmatpush.msra.mxu0 0.0
        %412 = vmatpush.msra.mxu0 0.0
        %413 = vmatpush.msra.mxu0 0.0
        %414 = vmatpush.msra.mxu0 0.0
        %415 = vmatpush.msra.mxu0 0.0
        %416 = vmatpush.msra.mxu0 0.0
        %417 = vmatpush.msra.mxu0 0.0
        %418 = vmatpush.msra.mxu0 0.0
        %419 = vmatpush.msra.mxu0 0.0
        %420 = vmatpush.msra.mxu0 0.0
        %421 = vmatpush.msra.mxu0 0.0
        %422 = vmatpush.msra.mxu0 0.0
        %423 = vmatpush.msra.mxu0 0.0
        %424 = vmatpush.msra.mxu0 0.0
        %425 = vmatpush.msra.mxu0 %v405
        %426 = vmatmul.f32.gmra.mxu0 %v402
        %v427 = vpop.f32.mrf.mxu0
        %v428 = vadd.f32 %v399, %v427
        %429 = vdwg.mxu0
        %430 = vmatpush.msra.mxu0 0.0
        %431 = vmatpush.msra.mxu0 0.0
        %432 = vmatpush.msra.mxu0 0.0
        %433 = vmatpush.msra.mxu0 0.0
        %434 = vmatpush.msra.mxu0 0.0
        %435 = vmatpush.msra.mxu0 0.0
        %436 = vmatpush.msra.mxu0 0.0
        %437 = vmatpush.msra.mxu0 0.0
        %438 = vmatpush.msra.mxu0 0.0
        %439 = vmatpush.msra.mxu0 0.0
        %440 = vmatpush.msra.mxu0 0.0
        %441 = vmatpush.msra.mxu0 0.0
        %442 = vmatpush.msra.mxu0 0.0
        %443 = vmatpush.msra.mxu0 0.0
        %444 = vmatpush.msra.mxu0 0.0
        %445 = vmatpush.msra.mxu0 %v408
        %446 = vmatmul.f32.gmra.mxu0 %v402
        %v447 = vpop.f32.mrf.mxu0
        %v448 = vadd.f32 %v399, %v447
        %449 = vdwg.mxu0
        %v450 = vtanh.pop %v428
        %v451 = vtanh.pop %v448
        %v452 = vld [vmem:[%s5] sm:$0xf]
        %v453 = vld [vmem:[%s6] sm:$0xf]
        %455 = vset.pattern.permute.xlu0 0
        %456 = vperm.xlu0 %455, %v453
        %v457 = vpop.permute.xlu0 %456
        %v459 = vrot.slane %v392, 4
        %v460 = vrot.slane %v393, 4
        %v462 = vsel %vm343, %v452, 0
        %v464 = vsel %vm347, %v459, 0
        %v466 = vsel %vm347, %v460, 0
        %468 = vmatpush.msra.mxu0 0.0
        %469 = vmatpush.msra.mxu0 0.0
        %470 = vmatpush.msra.mxu0 0.0
        %471 = vmatpush.msra.mxu0 0.0
        %472 = vmatpush.msra.mxu0 0.0
        %473 = vmatpush.msra.mxu0 0.0
        %474 = vmatpush.msra.mxu0 0.0
        %475 = vmatpush.msra.mxu0 0.0
        %476 = vmatpush.msra.mxu0 0.0
        %477 = vmatpush.msra.mxu0 0.0
        %478 = vmatpush.msra.mxu0 0.0
        %479 = vmatpush.msra.mxu0 0.0
        %480 = vmatpush.msra.mxu0 0.0
        %481 = vmatpush.msra.mxu0 0.0
        %482 = vmatpush.msra.mxu0 0.0
        %483 = vmatpush.msra.mxu0 %v464
        %484 = vmatmul.f32.gmra.mxu0 %v462
        %v485 = vpop.f32.mrf.mxu0
        %v486 = vadd.f32 %v457, %v485
        %487 = vdwg.mxu0
        %488 = vmatpush.msra.mxu0 0.0
        %489 = vmatpush.msra.mxu0 0.0
        %490 = vmatpush.msra.mxu0 0.0
        %491 = vmatpush.msra.mxu0 0.0
        %492 = vmatpush.msra.mxu0 0.0
        %493 = vmatpush.msra.mxu0 0.0
        %494 = vmatpush.msra.mxu0 0.0
        %495 = vmatpush.msra.mxu0 0.0
        %496 = vmatpush.msra.mxu0 0.0
        %497 = vmatpush.msra.mxu0 0.0
        %498 = vmatpush.msra.mxu0 0.0
        %499 = vmatpush.msra.mxu0 0.0
        %500 = vmatpush.msra.mxu0 0.0
        %501 = vmatpush.msra.mxu0 0.0
        %502 = vmatpush.msra.mxu0 0.0
        %503 = vmatpush.msra.mxu0 %v466
        %504 = vmatmul.f32.gmra.mxu0 %v462
        %v505 = vpop.f32.mrf.mxu0
        %v506 = vadd.f32 %v457, %v505
        %507 = vdwg.mxu0
        %v508 = vxor.u32 %v486, 2147483648
        %v509 = vxor.u32 %v506, 2147483648
        %v510 = vmul.f32 %v508, 1.442695
        %v511 = vpow.pop %v510
        %v512 = vmul.f32 %v509, 1.442695
        %v513 = vpow.pop %v512
        %v514 = vadd.f32 %v511, 1.0
        %v515 = vadd.f32 %v513, 1.0
        %v516 = vrcp.pop %v514
        %v517 = vmul.f32 %v514, %v516
        %v518 = vsub.f32 1.0, %v517
        %v519 = vmul.f32 %v516, %v518
        %v520 = vadd.f32 %v516, %v519
        %vm521 = vweird.f32 %v514
        %vm522 = vweird.f32 %v516
        %vm523 = vmor %vm521, %vm522
        %v524 = vsel %vm523, %v516, %v520
        %v525 = vand.u32 2147483647, %v514
        %vm526 = vcmp.eq.f32.partialorder %v525, 8.507059e+37
        %v527 = vand.u32 %v514, 2147483648
        %v528 = vor.u32 1.1754944e-38, %v527
        %v529 = vsel %vm526, %v528, %v524
        %v530 = vmul.f32 1.0, %v529
        %v531 = vrcp.pop %v515
        %v532 = vmul.f32 %v515, %v531
        %v533 = vsub.f32 1.0, %v532
        %v534 = vmul.f32 %v531, %v533
        %v535 = vadd.f32 %v531, %v534
        %vm536 = vweird.f32 %v515
        %vm537 = vweird.f32 %v531
        %vm538 = vmor %vm536, %vm537
        %v539 = vsel %vm538, %v531, %v535
        %v540 = vand.u32 2147483647, %v515
        %vm541 = vcmp.eq.f32.partialorder %v540, 8.507059e+37
        %v542 = vand.u32 %v515, 2147483648
        %v543 = vor.u32 1.1754944e-38, %v542
        %v544 = vsel %vm541, %v543, %v539
        %v545 = vmul.f32 1.0, %v544
        %v546 = vld [vmem:[#allocation2] sm:$0xf]
        %v547 = vld [vmem:[#allocation7] sm:$0xf]
        %v548 = vmul.f32 %v530, %v546
        %v549 = vsub.f32 1.0, %v530
        %v550 = vmul.f32 %v549, %v450
        %v551 = vadd.f32 %v548, %v550
        %v552 = vadd.f32 %v547, %v551
        %553 = vst [vmem:[%s320] sm:$0xf] %v551
        %v554 = vmul.f32 %v545, %v551
        %v555 = vsub.f32 1.0, %v545
        %v556 = vmul.f32 %v555, %v451
        %v557 = vadd.f32 %v554, %v556
        %v558 = vadd.f32 %v552, %v557
        %559 = vst [vmem:[%s320 + $0x4] sm:$0xf] %v557
        %560 = vst [vmem:[#allocation2] sm:$0xf] %v557
        %561 = vst [vmem:[#allocation7] sm:$0xf] %v558
        %s562 = sand.u32 %s187, 1
        %s563 = scalar_lea.sflag [#allocation5], %s562
        %s564 = sand.u32 %s187, 1
        %s565 = smul.addr %s564, 8
        %s566 = scalar_lea.vmem [#allocation6], %s565
        // Predicated region
        $region57: #{tpu_custom_call.1} parent=47 // pred_check
          %p567 = pneg %p197
        $region58: #{tpu_custom_call.1} parent=47 // pred_check_branch
          %569 = sbr.rel (%p567) target = $region60
        $region59: #{tpu_custom_call.1} parent=47 // pred_region
          %s570 = smul.u32 2, %s27
          %572 = vsyncadd %s563, 0
          %s573 = smul.addr %s570, 4
          %s574 = scalar_lea.hbm %s7, %s573
          %s576 = sshll.u32 %s566, 4
          %s577 = int_to_ptr.vmem [resolvable:$true] %s576
          %s578 = sshll.u32 %s574, 4
          %s579 = int_to_ptr.hbm [resolvable:$true] %s578
          %581 = dma.vmem_to_hbm [thread:$0]  %s577, 128, %s579, %s563
        $region60: #{tpu_custom_call.1} parent=47 // pred_fallthru
          _
        // Predicated region
        $region61: #{tpu_custom_call.1} parent=47 // pred_check
          %p582 = pneg %p218
        $region62: #{tpu_custom_call.1} parent=47 // pred_check_branch
          %584 = sbr.rel (%p582) target = $region64
        $region63: #{tpu_custom_call.1} parent=47 // pred_region
          %586 = vsyncadd [#allocation8], 0
          %s588 = sshll.u32 [#allocation7], 4
          %s589 = int_to_ptr.vmem [resolvable:$true] %s588
          %s590 = sshll.u32 %s8, 4
          %s591 = int_to_ptr.hbm [resolvable:$true] %s590
          %593 = dma.vmem_to_hbm [thread:$0]  %s589, 64, %s591, [#allocation8]
        $region64: #{tpu_custom_call.1} parent=47 // pred_fallthru
          _
        // Predicated region
        $region65: #{tpu_custom_call.1} parent=47 // pred_check
          %p594 = pneg %p218
        $region66: #{tpu_custom_call.1} parent=47 // pred_check_branch
          %596 = sbr.rel (%p594) target = $region68
        $region67: #{tpu_custom_call.1} parent=47 // pred_region
          %598 = dma.done [#allocation8], 64
        $region68: #{tpu_custom_call.1} parent=47 // pred_fallthru
          _
      $region48: #{tpu_custom_call.1} parent=5 // pred_fallthru
        _
      %p599 = scmp.le.s32.totalorder 2, %s22
      // Predicated region
      $region69: #{tpu_custom_call.1} parent=5 // pred_check
        %p600 = pneg %p599
      $region70: #{tpu_custom_call.1} parent=5 // pred_check_branch
        %602 = sbr.rel (%p600) target = $region72
      $region71: #{tpu_custom_call.1} parent=5 // pred_region
        %s603 = ssub.s32 %s22, 2
        // Predicated region
        $region73: #{tpu_custom_call.1} parent=71 // pred_check
          %p604 = pneg %p203
        $region74: #{tpu_custom_call.1} parent=71 // pred_check_branch
          %606 = sbr.rel (%p604) target = $region76
        $region75: #{tpu_custom_call.1} parent=71 // pred_region
          %s607 = sand.u32 %s188, 1
          %s608 = scalar_lea.sflag [#allocation5], %s607
          %s609 = sand.u32 %s188, 1
          %s610 = smul.addr %s609, 8
          %s611 = scalar_lea.vmem [#allocation6], %s610
          %613 = dma.done %s608, 128
        $region76: #{tpu_custom_call.1} parent=71 // pred_fallthru
          _
      $region72: #{tpu_custom_call.1} parent=5 // pred_fallthru
        _
    $region6: #{tpu_custom_call.1} parent=1 // loop_footer
      %s26 = sadd.s32 1, %s22
    $region7: #{tpu_custom_call.1} parent=1 // loop_footer_branch
      %21 = sbr.rel target = $region3
    $region8: #{tpu_custom_call.1} parent=1 // loop_exit
      _
    %614 = vsyncpa [#allocation4], 1
    %s615 = scalar_lea.sflag [#allocation4], 1
    %616 = vsyncpa %s615, 1
    %617 = vsyncpa [#allocation5], 1
    %s618 = scalar_lea.sflag [#allocation5], 1
    %619 = vsyncpa %s618, 1
    %620 = vsyncpa [#allocation8], 1

</llo_original>
